<compile_context>
chip_gen: v7x
topology: tpu7x:2x2x1
jax: 0.10.0
libtpu: 0.0.40
codegen_flags: <defaults>
</compile_context>

<pallas_src>
import jax
import jax.numpy as jnp
from jax import lax
from jax.experimental import pallas as pl
from jax.experimental.pallas import tpu as pltpu

# ---- configuration (constructor args of QNetwork) ---------------------------
STATE_NUMEL = 16
WIDTHS = [32, 32]
NUM_ACTIONS = 4
AFFINE_FACTOR = 0.5
AFFINE_OFFSET = -1.0
BATCH = 2

OUT_SUB = 8          # actions padded to one f32 sublane group (4 -> 8 rows)
TILE_B_MAX = 8192    # max batch rows per grid step (multiple of 128)


def qnetwork_kernel(x_ref, w1_ref, b1_ref, w2_ref, b2_ref, w3t_ref, b3t_ref, o_ref):
    # FixedAffine already folded into (w1, b1) by prepare_params().
    h = jnp.dot(x_ref[...], w1_ref[...], preferred_element_type=jnp.float32)
    h = jnp.maximum(h + b1_ref[...], 0.0)
    h = jnp.dot(h, w2_ref[...], preferred_element_type=jnp.float32)
    h = jnp.maximum(h + b2_ref[...], 0.0)
    # Transposed last layer: (8, 32) . (TB, 32) contracting on 32 -> (8, TB).
    # Output keeps the batch on the lane axis -> lane-dense unmasked stores
    # with only 8 rows of writeback instead of a 128-lane padded row per sample.
    q_t = lax.dot_general(
        w3t_ref[...], h,
        dimension_numbers=(((1,), (1,)), ((), ())),
        preferred_element_type=jnp.float32,
    )
    o_ref[...] = (q_t + b3t_ref[...]).astype(o_ref.dtype)


def _pick_tile(batch):
    """Batch rows per grid step (Python ints only; shapes are static under jit)."""
    if batch <= 128:
        # One full-array block: no (8,128) alignment constraint when the block
        # equals the array extent; grid has a single step anyway.
        return batch
    target = -(-batch // 2)                 # aim for >= 2 grid steps (v7x megacore)
    tile = -(-target // 128) * 128          # lane-dense multiple of 128
    return min(TILE_B_MAX, tile)


def prepare_params(params):
    """One-time parameter preprocessing (call once, reuse across forward calls).

    * Folds FixedAffine into layer 1: (x*f + o) @ W1 + b1 == x @ (f*W1) + (b1 + o*sum_in(W1)).
    * Builds the transposed, sublane-padded last layer: w3t (8, 32), b3t (8, 1).
    """
    (w1, b1), (w2, b2), (w3, b3) = params
    w1f = w1 * AFFINE_FACTOR
    b1f = b1 + AFFINE_OFFSET * jnp.sum(w1, axis=0, keepdims=True)
    w3t = jnp.zeros((OUT_SUB, w3.shape[0]), w3.dtype).at[:NUM_ACTIONS, :].set(w3.T)
    b3t = jnp.zeros((OUT_SUB, 1), b3.dtype).at[:NUM_ACTIONS, :].set(b3.T)
    return w1f, b1f, w2, b2, w3t, b3t


@jax.jit
def qnetwork_forward(x, prepared):
    w1f, b1f, w2, b2, w3t, b3t = prepared
    B = x.shape[0]
    tile_b = _pick_tile(B)
    grid = pl.cdiv(B, tile_b)

    out_t = pl.pallas_call(
        qnetwork_kernel,
        out_shape=jax.ShapeDtypeStruct((OUT_SUB, B), jnp.float32),
        grid=(grid,),
        in_specs=[
            pl.BlockSpec((tile_b, STATE_NUMEL), lambda i: (i, 0)),   # streamed x tile
            pl.BlockSpec(w1f.shape, lambda i: (0, 0)),               # resident weights
            pl.BlockSpec(b1f.shape, lambda i: (0, 0)),
            pl.BlockSpec(w2.shape, lambda i: (0, 0)),
            pl.BlockSpec(b2.shape, lambda i: (0, 0)),
            pl.BlockSpec(w3t.shape, lambda i: (0, 0)),
            pl.BlockSpec(b3t.shape, lambda i: (0, 0)),
        ],
        out_specs=pl.BlockSpec((OUT_SUB, tile_b), lambda i: (0, i)),
        compiler_params=pltpu.CompilerParams(
            dimension_semantics=("parallel",),
        ),
    )(x, w1f, b1f, w2, b2, w3t, b3t)

    # (8, B) -> (B, num_actions); the transpose is a tiny (4 x B) XLA op.
    return out_t[:NUM_ACTIONS, :].T


def init_params(key):
    """Deterministic init mimicking nn.Linear default (uniform +-1/sqrt(fan_in)).

    Weights stored as [in, out] (transposed vs. PyTorch's [out, in]) so the
    kernel computes x @ W directly. Biases are [1, out].
    """
    dims = [STATE_NUMEL] + WIDTHS + [NUM_ACTIONS]
    params = []
    for w_in, w_out in zip(dims[:-1], dims[1:]):
        key, kw, kb = jax.random.split(key, 3)
        bound = 1.0 / jnp.sqrt(jnp.float32(w_in))
        w = jax.random.uniform(kw, (w_in, w_out), jnp.float32, -bound, bound)
        b = jax.random.uniform(kb, (1, w_out), jnp.float32, -bound, bound)
        params.append((w, b))
    return params


def reference_forward(x, params):
    """Pure-JAX reference with the original (un-folded) module semantics."""
    h = x * AFFINE_FACTOR + AFFINE_OFFSET
    (w1, b1), (w2, b2), (w3, b3) = params
    h = jnp.maximum(h @ w1 + b1, 0.0)
    h = jnp.maximum(h @ w2 + b2, 0.0)
    return h @ w3 + b3


if __name__ == "__main__":
    key = jax.random.PRNGKey(0)
    key, kx = jax.random.split(key)
    params = init_params(key)
    prepared = prepare_params(params)

    # Small demo shape (batch=2): single full-array block, one grid step.
    x = jax.random.normal(kx, (BATCH, STATE_NUMEL), jnp.float32)
    q = jax.block_until_ready(qnetwork_forward(x, prepared))
    q_ref = reference_forward(x, params)
    assert q.shape == (BATCH, NUM_ACTIONS)
    assert jnp.allclose(q, q_ref, atol=1e-4, rtol=1e-4), (q, q_ref)

    # Larger ragged batch: 2 grid steps (v7x megacore path) with a partial
    # tail block handled by Pallas edge-block masking (no jnp.pad copy).
    key, kx2 = jax.random.split(key)
    x_big = jax.random.normal(kx2, (1027, STATE_NUMEL), jnp.float32)
    q_big = jax.block_until_ready(qnetwork_forward(x_big, prepared))
    q_big_ref = reference_forward(x_big, params)
    assert q_big.shape == (1027, NUM_ACTIONS)
    assert jnp.allclose(q_big, q_big_ref, atol=1e-4, rtol=1e-4)

    print("KERNEL_OK")
</pallas_src>

<mosaic_0001>
module attributes {stable_mosaic.version = 11 : i64} {
  func.func @qnetwork_kernel(%arg0: i32, %arg1: memref<2x16xf32, #tpu.memory_space<vmem>>, %arg2: memref<16x32xf32, #tpu.memory_space<vmem>>, %arg3: memref<1x32xf32, #tpu.memory_space<vmem>>, %arg4: memref<32x32xf32, #tpu.memory_space<vmem>>, %arg5: memref<1x32xf32, #tpu.memory_space<vmem>>, %arg6: memref<8x32xf32, #tpu.memory_space<vmem>>, %arg7: memref<8x1xf32, #tpu.memory_space<vmem>>, %arg8: memref<8x2xf32, #tpu.memory_space<vmem>>) attributes {dimension_semantics = [#tpu.dimension_semantics<parallel>], iteration_bounds = array<i64: 1>, scalar_prefetch = 0 : i64, scratch_operands = 0 : i64, tpu.core_type = #tpu.core_type<tc>, window_params = [{transform_indices = @transform_0, window_bounds = array<i64: 2, 16>}, {pipeline_mode = #tpu.pipeline_mode<synchronous>, transform_indices = @transform_1, window_bounds = array<i64: 16, 32>}, {pipeline_mode = #tpu.pipeline_mode<synchronous>, transform_indices = @transform_2, window_bounds = array<i64: 1, 32>}, {pipeline_mode = #tpu.pipeline_mode<synchronous>, transform_indices = @transform_3, window_bounds = array<i64: 32, 32>}, {pipeline_mode = #tpu.pipeline_mode<synchronous>, transform_indices = @transform_4, window_bounds = array<i64: 1, 32>}, {pipeline_mode = #tpu.pipeline_mode<synchronous>, transform_indices = @transform_5, window_bounds = array<i64: 8, 32>}, {pipeline_mode = #tpu.pipeline_mode<synchronous>, transform_indices = @transform_6, window_bounds = array<i64: 8, 1>}, {transform_indices = @transform_7, window_bounds = array<i64: 8, 2>}]} {
    %c0 = arith.constant 0 : index
    %c0_0 = arith.constant 0 : index
    %0 = vector.load %arg1[%c0, %c0_0] : memref<2x16xf32, #tpu.memory_space<vmem>>, vector<2x16xf32>
    %c0_1 = arith.constant 0 : index
    %c0_2 = arith.constant 0 : index
    %1 = vector.load %arg2[%c0_1, %c0_2] : memref<16x32xf32, #tpu.memory_space<vmem>>, vector<16x32xf32>
    %cst = arith.constant dense<0.000000e+00> : vector<2x32xf32>
    %2 = tpu.matmul %0, %1, %cst {dimension_numbers = #tpu.dot_dimension_numbers<[1], [0], [0], [1], [0, 0, 1, 1], [], []>} : vector<2x16xf32>, vector<16x32xf32>, vector<2x32xf32> -> vector<2x32xf32>
    %c0_3 = arith.constant 0 : index
    %c0_4 = arith.constant 0 : index
    %3 = vector.load %arg3[%c0_3, %c0_4] : memref<1x32xf32, #tpu.memory_space<vmem>>, vector<1x32xf32>
    %4 = vector.broadcast %3 : vector<1x32xf32> to vector<2x32xf32>
    %5 = arith.addf %2, %4 : vector<2x32xf32>
    %cst_5 = arith.constant 0.000000e+00 : f32
    %6 = vector.broadcast %cst_5 : f32 to vector<2x32xf32>
    %7 = arith.maximumf %5, %6 : vector<2x32xf32>
    %c0_6 = arith.constant 0 : index
    %c0_7 = arith.constant 0 : index
    %8 = vector.load %arg4[%c0_6, %c0_7] : memref<32x32xf32, #tpu.memory_space<vmem>>, vector<32x32xf32>
    %cst_8 = arith.constant dense<0.000000e+00> : vector<2x32xf32>
    %9 = tpu.matmul %7, %8, %cst_8 {dimension_numbers = #tpu.dot_dimension_numbers<[1], [0], [0], [1], [0, 0, 1, 1], [], []>} : vector<2x32xf32>, vector<32x32xf32>, vector<2x32xf32> -> vector<2x32xf32>
    %c0_9 = arith.constant 0 : index
    %c0_10 = arith.constant 0 : index
    %10 = vector.load %arg5[%c0_9, %c0_10] : memref<1x32xf32, #tpu.memory_space<vmem>>, vector<1x32xf32>
    %11 = vector.broadcast %10 : vector<1x32xf32> to vector<2x32xf32>
    %12 = arith.addf %9, %11 : vector<2x32xf32>
    %cst_11 = arith.constant 0.000000e+00 : f32
    %13 = vector.broadcast %cst_11 : f32 to vector<2x32xf32>
    %14 = arith.maximumf %12, %13 : vector<2x32xf32>
    %c0_12 = arith.constant 0 : index
    %c0_13 = arith.constant 0 : index
    %15 = vector.load %arg6[%c0_12, %c0_13] : memref<8x32xf32, #tpu.memory_space<vmem>>, vector<8x32xf32>
    %cst_14 = arith.constant dense<0.000000e+00> : vector<8x2xf32>
    %16 = tpu.matmul %15, %14, %cst_14 {dimension_numbers = #tpu.dot_dimension_numbers<[1], [1], [0], [0], [0, 0, 1, 0], [], []>} : vector<8x32xf32>, vector<2x32xf32>, vector<8x2xf32> -> vector<8x2xf32>
    %c0_15 = arith.constant 0 : index
    %c0_16 = arith.constant 0 : index
    %17 = vector.load %arg7[%c0_15, %c0_16] : memref<8x1xf32, #tpu.memory_space<vmem>>, vector<8x1xf32>
    %18 = vector.broadcast %17 : vector<8x1xf32> to vector<8x2xf32>
    %19 = arith.addf %16, %18 : vector<8x2xf32>
    %c0_17 = arith.constant 0 : index
    %c0_18 = arith.constant 0 : index
    %20 = vector.load %arg8[%c0_17, %c0_18] : memref<8x2xf32, #tpu.memory_space<vmem>>, vector<8x2xf32>
    tpu.vector_store %arg8[%c0_17, %c0_18], %19 {strides = array<i32>} : memref<8x2xf32, #tpu.memory_space<vmem>>, vector<8x2xf32>,
    return
  }
  func.func @transform_0(%arg0: i32) -> (i32, i32) {
    %c0_i32 = arith.constant 0 : i32
    %c0_i32_0 = arith.constant 0 : i32
    return %arg0, %c0_i32 : i32, i32
  }
  func.func @transform_1(%arg0: i32) -> (i32, i32) {
    %c0_i32 = arith.constant 0 : i32
    %c0_i32_0 = arith.constant 0 : i32
    %c0_i32_1 = arith.constant 0 : i32
    return %c0_i32, %c0_i32_0 : i32, i32
  }
  func.func @transform_2(%arg0: i32) -> (i32, i32) {
    %c0_i32 = arith.constant 0 : i32
    %c0_i32_0 = arith.constant 0 : i32
    %c0_i32_1 = arith.constant 0 : i32
    return %c0_i32, %c0_i32_0 : i32, i32
  }
  func.func @transform_3(%arg0: i32) -> (i32, i32) {
    %c0_i32 = arith.constant 0 : i32
    %c0_i32_0 = arith.constant 0 : i32
    %c0_i32_1 = arith.constant 0 : i32
    return %c0_i32, %c0_i32_0 : i32, i32
  }
  func.func @transform_4(%arg0: i32) -> (i32, i32) {
    %c0_i32 = arith.constant 0 : i32
    %c0_i32_0 = arith.constant 0 : i32
    %c0_i32_1 = arith.constant 0 : i32
    return %c0_i32, %c0_i32_0 : i32, i32
  }
  func.func @transform_5(%arg0: i32) -> (i32, i32) {
    %c0_i32 = arith.constant 0 : i32
    %c0_i32_0 = arith.constant 0 : i32
    %c0_i32_1 = arith.constant 0 : i32
    return %c0_i32, %c0_i32_0 : i32, i32
  }
  func.func @transform_6(%arg0: i32) -> (i32, i32) {
    %c0_i32 = arith.constant 0 : i32
    %c0_i32_0 = arith.constant 0 : i32
    %c0_i32_1 = arith.constant 0 : i32
    return %c0_i32, %c0_i32_0 : i32, i32
  }
  func.func @transform_7(%arg0: i32) -> (i32, i32) {
    %c0_i32 = arith.constant 0 : i32
    %c0_i32_0 = arith.constant 0 : i32
    return %c0_i32, %arg0 : i32, i32
  }
}

</mosaic_0001>

<llo_original>
// kernel: qnetwork_forward.1
$region0: #{qnetwork_forward.1}
  #allocation0 [shape = 'u32[]', space=smem, size = 0x4, offset = 0x4, fixed_abs, tag = 'smem constant byte address 0x4 - core index']
  #allocation1 [shape = 'u32[144,128]{1,0:T(1,128)}', space=vmem, size = 0x12000, scoped, tag = 'internal scratch']
  %s0 = inlined_call_operand.vmem [shape: f32[2,16], index: 0, kind: input, shape index: {}]
  %s1 = inlined_call_operand.hbm [shape: f32[16,32], index: 1, kind: input, shape index: {}]
  %s2 = inlined_call_operand.vmem [shape: f32[1,32], index: 2, kind: input, shape index: {}]
  %s3 = inlined_call_operand.hbm [shape: f32[32,32], index: 3, kind: input, shape index: {}]
  %s4 = inlined_call_operand.vmem [shape: f32[1,32], index: 4, kind: input, shape index: {}]
  %s5 = inlined_call_operand.vmem [shape: f32[8,32], index: 5, kind: input, shape index: {}]
  %s6 = inlined_call_operand.vmem [shape: f32[8,1], index: 6, kind: input, shape index: {}]
  %s7 = inlined_call_operand.vmem [shape: f32[8,2], index: 7, kind: output, shape index: {}]
  %s8 = sld [smem:[#allocation0]]
  $region46: #{qnetwork_forward.1} parent=0
    _
  %s10 = ssub.s32 1, %s8
  %s11 = scalar_select 0, %s10, %s8
  $region1: #{qnetwork_forward.1} parent=0
    #allocation2 [shape = 'u8[8192]{0}', space=vmem, size = 0x2000, scoped, tag = 'input window, operand 1, single buffered']
    #allocation3 [shape = 's32[1]{0}', space=sflag, size = 0x4, scoped, tag = 'scoped memory for qnetwork_forward.1']
    #allocation4 [shape = 'u8[16384]{0}', space=vmem, size = 0x4000, scoped, tag = 'input window, operand 3, single buffered']
    #allocation5 [shape = 's32[1]{0}', space=sflag, size = 0x4, scoped, tag = 'scoped memory for qnetwork_forward.1']
    %12 = vsyncpa [#allocation3], 0
    %13 = vsyncpa [#allocation5], 0
    // Predicated region
    $region2: #{qnetwork_forward.1} parent=1 // pred_check
      _
    $region3: #{qnetwork_forward.1} parent=1 // pred_check_branch
      %15 = sbr.rel (0) target = $region5
    $region4: #{qnetwork_forward.1} parent=1 // pred_region
      _
    $region5: #{qnetwork_forward.1} parent=1 // pred_fallthru
      _
    // Predicated region
    $region6: #{qnetwork_forward.1} parent=1 // pred_check
      _
    $region7: #{qnetwork_forward.1} parent=1 // pred_check_branch
      %17 = sbr.rel (0) target = $region9
    $region8: #{qnetwork_forward.1} parent=1 // pred_region
      %s19 = ssub.s32 256, 256
      %20 = vsyncadd [#allocation3], %s19
      %s21 = sshll.u32 [#allocation2], 4
      %s22 = int_to_ptr.vmem [resolvable:$true] %s21
      %27 = dma.hbm_to_vmem [thread:$0]  %s1, 256, %s22, [#allocation3], 128, 128, 8
    $region9: #{qnetwork_forward.1} parent=1 // pred_fallthru
      _
    // Predicated region
    $region10: #{qnetwork_forward.1} parent=1 // pred_check
      _
    $region11: #{qnetwork_forward.1} parent=1 // pred_check_branch
      %29 = sbr.rel (0) target = $region13
    $region12: #{qnetwork_forward.1} parent=1 // pred_region
      _
    $region13: #{qnetwork_forward.1} parent=1 // pred_fallthru
      _
    // Predicated region
    $region14: #{qnetwork_forward.1} parent=1 // pred_check
      _
    $region15: #{qnetwork_forward.1} parent=1 // pred_check_branch
      %31 = sbr.rel (0) target = $region17
    $region16: #{qnetwork_forward.1} parent=1 // pred_region
      %s33 = ssub.s32 512, 512
      %34 = vsyncadd [#allocation5], %s33
      %s35 = sshll.u32 [#allocation4], 4
      %s36 = int_to_ptr.vmem [resolvable:$true] %s35
      %41 = dma.hbm_to_vmem [thread:$0]  %s3, 512, %s36, [#allocation5], 128, 128, 8
    $region17: #{qnetwork_forward.1} parent=1 // pred_fallthru
      _
    // Predicated region
    $region18: #{qnetwork_forward.1} parent=1 // pred_check
      _
    $region19: #{qnetwork_forward.1} parent=1 // pred_check_branch
      %43 = sbr.rel (0) target = $region21
    $region20: #{qnetwork_forward.1} parent=1 // pred_region
      _
    $region21: #{qnetwork_forward.1} parent=1 // pred_fallthru
      _
    // Predicated region
    $region22: #{qnetwork_forward.1} parent=1 // pred_check
      _
    $region23: #{qnetwork_forward.1} parent=1 // pred_check_branch
      %45 = sbr.rel (0) target = $region25
    $region24: #{qnetwork_forward.1} parent=1 // pred_region
      _
    $region25: #{qnetwork_forward.1} parent=1 // pred_fallthru
      _
    // Predicated region
    $region26: #{qnetwork_forward.1} parent=1 // pred_check
      _
    $region27: #{qnetwork_forward.1} parent=1 // pred_check_branch
      %47 = sbr.rel (0) target = $region29
    $region28: #{qnetwork_forward.1} parent=1 // pred_region
      _
    $region29: #{qnetwork_forward.1} parent=1 // pred_fallthru
      _
    // Predicated region
    $region30: #{qnetwork_forward.1} parent=1 // pred_check
      _
    $region31: #{qnetwork_forward.1} parent=1 // pred_check_branch
      %49 = sbr.rel (0) target = $region33
    $region32: #{qnetwork_forward.1} parent=1 // pred_region
      %50 = dma.done [#allocation3], 256
    $region33: #{qnetwork_forward.1} parent=1 // pred_fallthru
      _
    // Predicated region
    $region34: #{qnetwork_forward.1} parent=1 // pred_check
      _
    $region35: #{qnetwork_forward.1} parent=1 // pred_check_branch
      %52 = sbr.rel (0) target = $region37
    $region36: #{qnetwork_forward.1} parent=1 // pred_region
      %53 = dma.done [#allocation5], 512
    $region37: #{qnetwork_forward.1} parent=1 // pred_fallthru
      _
    %v54 = vld [vmem:[%s0] sm:$0x3]
    %v55 = vld [vmem:[#allocation2] sm:$0xff]
    %v56 = vld [vmem:[#allocation2 + $0x8] sm:$0xff]
    %v57 = vld [vmem:[%s2] sm:$0x1]
    %v59 = vlaneseq
    %v60 = vshrl.u32 %v59, 7
    %v61 = vsub.s32 0, %v60
    %v62 = vrot.slane %v57, %v61
    %vm64 = vcmask 130048
    %v66 = vsel %vm64, %v54, 0
    %68 = vmatprep.subr.mxu0 0.0
    %69 = vmatpush1.msra.mxu0 %v55
    %70 = vmatprep.subr.mxu0 0.0
    %71 = vmatpush1.msra.mxu0 %v56
    %72 = vmatprep.subr.mxu0 0.0
    %73 = vmatpush1.msra.mxu0 0.0
    %74 = vmatprep.subr.mxu0 0.0
    %75 = vmatpush1.msra.mxu0 0.0
    %76 = vmatprep.subr.mxu0 0.0
    %77 = vmatpush1.msra.mxu0 0.0
    %78 = vmatprep.subr.mxu0 0.0
    %79 = vmatpush1.msra.mxu0 0.0
    %80 = vmatprep.subr.mxu0 0.0
    %81 = vmatpush1.msra.mxu0 0.0
    %82 = vmatprep.subr.mxu0 0.0
    %83 = vmatpush1.msra.mxu0 0.0
    %84 = vmatprep.subr.mxu0 0.0
    %85 = vmatpush1.msra.mxu0 0.0
    %86 = vmatprep.subr.mxu0 0.0
    %87 = vmatpush1.msra.mxu0 0.0
    %88 = vmatprep.subr.mxu0 0.0
    %89 = vmatpush1.msra.mxu0 0.0
    %90 = vmatprep.subr.mxu0 0.0
    %91 = vmatpush1.msra.mxu0 0.0
    %92 = vmatprep.subr.mxu0 0.0
    %93 = vmatpush1.msra.mxu0 0.0
    %94 = vmatprep.subr.mxu0 0.0
    %95 = vmatpush1.msra.mxu0 0.0
    %96 = vmatprep.subr.mxu0 0.0
    %97 = vmatpush1.msra.mxu0 0.0
    %98 = vmatprep.subr.mxu0 0.0
    %99 = vmatpush1.msra.mxu0 0.0
    %100 = vmatprep.subr.mxu0 0.0
    %101 = vmatpush1.msra.mxu0 0.0
    %102 = vmatprep.subr.mxu0 0.0
    %103 = vmatpush1.msra.mxu0 0.0
    %104 = vmatprep.subr.mxu0 0.0
    %105 = vmatpush1.msra.mxu0 0.0
    %106 = vmatprep.subr.mxu0 0.0
    %107 = vmatpush1.msra.mxu0 0.0
    %108 = vmatprep.subr.mxu0 0.0
    %109 = vmatpush1.msra.mxu0 0.0
    %110 = vmatprep.subr.mxu0 0.0
    %111 = vmatpush1.msra.mxu0 0.0
    %112 = vmatprep.subr.mxu0 0.0
    %113 = vmatpush1.msra.mxu0 0.0
    %114 = vmatprep.subr.mxu0 0.0
    %115 = vmatpush1.msra.mxu0 0.0
    %116 = vmatprep.subr.mxu0 0.0
    %117 = vmatpush1.msra.mxu0 0.0
    %118 = vmatprep.subr.mxu0 0.0
    %119 = vmatpush1.msra.mxu0 0.0
    %120 = vmatprep.subr.mxu0 0.0
    %121 = vmatpush1.msra.mxu0 0.0
    %122 = vmatprep.subr.mxu0 0.0
    %123 = vmatpush1.msra.mxu0 0.0
    %124 = vmatprep.subr.mxu0 0.0
    %125 = vmatpush1.msra.mxu0 0.0
    %126 = vmatprep.subr.mxu0 0.0
    %127 = vmatpush1.msra.mxu0 0.0
    %128 = vmatprep.subr.mxu0 0.0
    %129 = vmatpush1.msra.mxu0 0.0
    %130 = vmatprep.subr.mxu0 0.0
    %131 = vmatpush1.msra.mxu0 0.0
    %132 = vmatprep.mubr.f32.mxu0 0.0
    %133 = vmatmul.mubr.f32.gmra.mrb[0].mxu0 %v66
    %v134 = vpop.f32.mrb[0].mxu0
    %v135 = vadd.f32 %v62, %v134
    %v136 = vpop.f32.mrb[0].mxu0
    %137 = vdwg.mxu0
    %v138 = vmax.f32 %v135, 0.0
    %v139 = vld [vmem:[#allocation4] sm:$0xff]
    %v140 = vld [vmem:[#allocation4 + $0x8] sm:$0xff]
    %v141 = vld [vmem:[#allocation4 + $0x10] sm:$0xff]
    %v142 = vld [vmem:[#allocation4 + $0x18] sm:$0xff]
    %v143 = vld [vmem:[%s4] sm:$0x1]
    %v145 = vlaneseq
    %v146 = vshrl.u32 %v145, 7
    %v147 = vsub.s32 0, %v146
    %v148 = vrot.slane %v143, %v147
    %vm150 = vcmask 261120
    %v152 = vsel %vm150, %v138, 0
    %154 = vmatprep.subr.mxu0 0.0
    %155 = vmatpush1.msra.mxu0 %v139
    %156 = vmatprep.subr.mxu0 0.0
    %157 = vmatpush1.msra.mxu0 %v140
    %158 = vmatprep.subr.mxu0 0.0
    %159 = vmatpush1.msra.mxu0 %v141
    %160 = vmatprep.subr.mxu0 0.0
    %161 = vmatpush1.msra.mxu0 %v142
    %162 = vmatprep.subr.mxu0 0.0
    %163 = vmatpush1.msra.mxu0 0.0
    %164 = vmatprep.subr.mxu0 0.0
    %165 = vmatpush1.msra.mxu0 0.0
    %166 = vmatprep.subr.mxu0 0.0
    %167 = vmatpush1.msra.mxu0 0.0
    %168 = vmatprep.subr.mxu0 0.0
    %169 = vmatpush1.msra.mxu0 0.0
    %170 = vmatprep.subr.mxu0 0.0
    %171 = vmatpush1.msra.mxu0 0.0
    %172 = vmatprep.subr.mxu0 0.0
    %173 = vmatpush1.msra.mxu0 0.0
    %174 = vmatprep.subr.mxu0 0.0
    %175 = vmatpush1.msra.mxu0 0.0
    %176 = vmatprep.subr.mxu0 0.0
    %177 = vmatpush1.msra.mxu0 0.0
    %178 = vmatprep.subr.mxu0 0.0
    %179 = vmatpush1.msra.mxu0 0.0
    %180 = vmatprep.subr.mxu0 0.0
    %181 = vmatpush1.msra.mxu0 0.0
    %182 = vmatprep.subr.mxu0 0.0
    %183 = vmatpush1.msra.mxu0 0.0
    %184 = vmatprep.subr.mxu0 0.0
    %185 = vmatpush1.msra.mxu0 0.0
    %186 = vmatprep.subr.mxu0 0.0
    %187 = vmatpush1.msra.mxu0 0.0
    %188 = vmatprep.subr.mxu0 0.0
    %189 = vmatpush1.msra.mxu0 0.0
    %190 = vmatprep.subr.mxu0 0.0
    %191 = vmatpush1.msra.mxu0 0.0
    %192 = vmatprep.subr.mxu0 0.0
    %193 = vmatpush1.msra.mxu0 0.0
    %194 = vmatprep.subr.mxu0 0.0
    %195 = vmatpush1.msra.mxu0 0.0
    %196 = vmatprep.subr.mxu0 0.0
    %197 = vmatpush1.msra.mxu0 0.0
    %198 = vmatprep.subr.mxu0 0.0
    %199 = vmatpush1.msra.mxu0 0.0
    %200 = vmatprep.subr.mxu0 0.0
    %201 = vmatpush1.msra.mxu0 0.0
    %202 = vmatprep.subr.mxu0 0.0
    %203 = vmatpush1.msra.mxu0 0.0
    %204 = vmatprep.subr.mxu0 0.0
    %205 = vmatpush1.msra.mxu0 0.0
    %206 = vmatprep.subr.mxu0 0.0
    %207 = vmatpush1.msra.mxu0 0.0
    %208 = vmatprep.subr.mxu0 0.0
    %209 = vmatpush1.msra.mxu0 0.0
    %210 = vmatprep.subr.mxu0 0.0
    %211 = vmatpush1.msra.mxu0 0.0
    %212 = vmatprep.subr.mxu0 0.0
    %213 = vmatpush1.msra.mxu0 0.0
    %214 = vmatprep.subr.mxu0 0.0
    %215 = vmatpush1.msra.mxu0 0.0
    %216 = vmatprep.subr.mxu0 0.0
    %217 = vmatpush1.msra.mxu0 0.0
    %218 = vmatprep.mubr.f32.mxu0 0.0
    %219 = vmatmul.mubr.f32.gmra.mrb[0].mxu0 %v152
    %v220 = vpop.f32.mrb[0].mxu0
    %v221 = vadd.f32 %v148, %v220
    %v222 = vpop.f32.mrb[0].mxu0
    %223 = vdwg.mxu0
    %v224 = vmax.f32 %v221, 0.0
    %v225 = vld [vmem:[%s5] sm:$0xff]
    %v226 = vld [vmem:[%s6] sm:$0xff]
    %228 = vset.pattern.permute.xlu0 0
    %229 = vperm.xlu0 %228, %v226
    %v230 = vpop.permute.xlu0 %229
    %v233 = vsel %vm150, %v225, 0
    %v236 = vsel %vm150, %v224, 0
    %238 = vmatprep.subr.mxu0 0.0
    %239 = vmatpush1.xpose.msra.mxu0 %v236
    %240 = vmatprep.subr.mxu0 0.0
    %241 = vmatpush1.xpose.msra.mxu0 0.0
    %242 = vmatprep.subr.mxu0 0.0
    %243 = vmatpush1.xpose.msra.mxu0 0.0
    %244 = vmatprep.subr.mxu0 0.0
    %245 = vmatpush1.xpose.msra.mxu0 0.0
    %246 = vmatprep.subr.mxu0 0.0
    %247 = vmatpush1.xpose.msra.mxu0 0.0
    %248 = vmatprep.subr.mxu0 0.0
    %249 = vmatpush1.xpose.msra.mxu0 0.0
    %250 = vmatprep.subr.mxu0 0.0
    %251 = vmatpush1.xpose.msra.mxu0 0.0
    %252 = vmatprep.subr.mxu0 0.0
    %253 = vmatpush1.xpose.msra.mxu0 0.0
    %254 = vmatprep.subr.mxu0 0.0
    %255 = vmatpush1.xpose.msra.mxu0 0.0
    %256 = vmatprep.subr.mxu0 0.0
    %257 = vmatpush1.xpose.msra.mxu0 0.0
    %258 = vmatprep.subr.mxu0 0.0
    %259 = vmatpush1.xpose.msra.mxu0 0.0
    %260 = vmatprep.subr.mxu0 0.0
    %261 = vmatpush1.xpose.msra.mxu0 0.0
    %262 = vmatprep.subr.mxu0 0.0
    %263 = vmatpush1.xpose.msra.mxu0 0.0
    %264 = vmatprep.subr.mxu0 0.0
    %265 = vmatpush1.xpose.msra.mxu0 0.0
    %266 = vmatprep.subr.mxu0 0.0
    %267 = vmatpush1.xpose.msra.mxu0 0.0
    %268 = vmatprep.subr.mxu0 0.0
    %269 = vmatpush1.xpose.msra.mxu0 0.0
    %270 = vmatprep.subr.mxu0 0.0
    %271 = vmatpush1.xpose.msra.mxu0 0.0
    %272 = vmatprep.subr.mxu0 0.0
    %273 = vmatpush1.xpose.msra.mxu0 0.0
    %274 = vmatprep.subr.mxu0 0.0
    %275 = vmatpush1.xpose.msra.mxu0 0.0
    %276 = vmatprep.subr.mxu0 0.0
    %277 = vmatpush1.xpose.msra.mxu0 0.0
    %278 = vmatprep.subr.mxu0 0.0
    %279 = vmatpush1.xpose.msra.mxu0 0.0
    %280 = vmatprep.subr.mxu0 0.0
    %281 = vmatpush1.xpose.msra.mxu0 0.0
    %282 = vmatprep.subr.mxu0 0.0
    %283 = vmatpush1.xpose.msra.mxu0 0.0
    %284 = vmatprep.subr.mxu0 0.0
    %285 = vmatpush1.xpose.msra.mxu0 0.0
    %286 = vmatprep.subr.mxu0 0.0
    %287 = vmatpush1.xpose.msra.mxu0 0.0
    %288 = vmatprep.subr.mxu0 0.0
    %289 = vmatpush1.xpose.msra.mxu0 0.0
    %290 = vmatprep.subr.mxu0 0.0
    %291 = vmatpush1.xpose.msra.mxu0 0.0
    %292 = vmatprep.subr.mxu0 0.0
    %293 = vmatpush1.xpose.msra.mxu0 0.0
    %294 = vmatprep.subr.mxu0 0.0
    %295 = vmatpush1.xpose.msra.mxu0 0.0
    %296 = vmatprep.subr.mxu0 0.0
    %297 = vmatpush1.xpose.msra.mxu0 0.0
    %298 = vmatprep.subr.mxu0 0.0
    %299 = vmatpush1.xpose.msra.mxu0 0.0
    %300 = vmatprep.subr.mxu0 0.0
    %301 = vmatpush1.xpose.msra.mxu0 0.0
    %302 = vmatprep.mubr.f32.mxu0 0.0
    %303 = vmatmul.mubr.f32.gmra.mrb[0].mxu0 %v233
    %v304 = vpop.f32.mrb[0].mxu0
    %v305 = vadd.f32 %v230, %v304
    %v306 = vpop.f32.mrb[0].mxu0
    %307 = vdwg.mxu0
    %vm308 = vcmask 15360
    %309 = vst.msk [vmem:[%s7] sm:$0xff] %vm308, %v305
    // Predicated region
    $region38: #{qnetwork_forward.1} parent=1 // pred_check
      _
    $region39: #{qnetwork_forward.1} parent=1 // pred_check_branch
      %311 = sbr.rel (0) target = $region41
    $region40: #{qnetwork_forward.1} parent=1 // pred_region
      _
    $region41: #{qnetwork_forward.1} parent=1 // pred_fallthru
      _
    // Predicated region
    $region42: #{qnetwork_forward.1} parent=1 // pred_check
      _
    $region43: #{qnetwork_forward.1} parent=1 // pred_check_branch
      %313 = sbr.rel (0) target = $region45
    $region44: #{qnetwork_forward.1} parent=1 // pred_region
      _
    $region45: #{qnetwork_forward.1} parent=1 // pred_fallthru
      _
    %314 = vsyncpa [#allocation3], 1
    %315 = vsyncpa [#allocation5], 1

</llo_original>
